<compile_context>
chip_gen: v5e
topology: v5e:2x2
jax: 0.10.0
libtpu: 0.0.40
codegen_flags: <defaults>
</compile_context>

<pallas_src>
import functools

import jax
import jax.numpy as jnp
import numpy as np
from jax import lax
from jax.experimental import pallas as pl
from jax.experimental.pallas import tpu as pltpu

_LANE = 128


def _round_up(x, m):
    return (x + m - 1) // m * m


def _vmem_budget():
    """(vmem_limit_bytes, per-step working-set budget), sized per generation."""
    try:
        phys = int(pltpu.get_tpu_info().vmem_capacity_bytes)
    except Exception:
        phys = 64 * 1024 * 1024                    # conservative: v7x = 64 MiB/TC
    limit = min(phys * 3 // 4, 96 * 1024 * 1024)   # 48 MiB on v7x, 96 MiB on v5e/v6e
    return limit, limit // 2                       # headroom for Mosaic scratch


def _step_vmem_bytes(rows, KC, Cout_p, in_itemsize):
    """Padding-aware VMEM use of one grid step (Pallas double-buffers blocks)."""
    kc_pad = _round_up(KC, _LANE)                  # minor dim padded to 128 lanes
    co_pad = _round_up(Cout_p, _LANE)
    in_rows = _round_up(rows, 16)                  # bf16 sublane packing
    out_rows = _round_up(rows, 8)                  # f32 sublanes
    in_bytes = 2 * in_rows * kc_pad * in_itemsize
    out_bytes = 2 * out_rows * co_pad * 4
    w_bytes = 2 * _round_up(KC, 16) * co_pad * in_itemsize
    b_bytes = 2 * 8 * co_pad * 4
    return in_bytes + out_bytes + w_bytes + b_bytes


def _choose_tile_h(H_out, W_out, KC, Cout_p, in_itemsize, budget_bytes,
                   max_rows=4096):
    """Largest divisor of H_out whose padded footprint fits the VMEM budget."""
    cands = [th for th in range(1, H_out + 1)
             if H_out % th == 0 and (th == H_out or (th * W_out) % 16 == 0)]
    fits = [th for th in cands
            if th * W_out <= max_rows
            and _step_vmem_bytes(th * W_out, KC, Cout_p, in_itemsize) <= budget_bytes]
    return max(fits) if fits else min(cands)


def _choose_sub_rows(rows, Cout_p):
    """Row-chunk size: divides rows, multiple of 8, live f32 tile <= ~64 KiB."""
    cap = min(rows, max(8, (64 * 1024) // (4 * Cout_p)))
    for sr in range(cap, 7, -1):
        if rows % sr == 0 and sr % 8 == 0:
            return sr
    return rows                                    # tiny / unaligned: single chunk


def _simconv_kernel(x_ref, w_ref, b_ref, o_ref, *, sub_rows):
    """relu(patches @ w + b) on one (image, row-strip) block.

    x_ref : (1, rows, k*k*Cin)  bf16 im2col patches (contraction pre-packed).
    w_ref : (k*k*Cin, Cout_p)   bf16 BN-folded packed weights.
    b_ref : (1, Cout_p)         f32 BN-folded bias.
    o_ref : (1, rows, Cout_p)   f32 lane-dense output slab.
    """
    rows = o_ref.shape[1]
    cout_p = o_ref.shape[2]
    w = w_ref[...]
    # Bias broadcast hoisted once (JAX does not CSE broadcast_in_dim).
    bias = jnp.broadcast_to(b_ref[...], (sub_rows, cout_p))
    # 8-aligned row chunks keep stores unmasked and the live f32 tile in vregs.
    for r0 in range(0, rows, sub_rows):
        patch = x_ref[0, r0:r0 + sub_rows, :]
        acc = jnp.dot(patch, w, preferred_element_type=jnp.float32)
        o_ref[0, r0:r0 + sub_rows, :] = jnp.maximum(acc + bias, 0.0).astype(o_ref.dtype)


def simconv_forward(x_nchw, w_hwio, bias, *, stride=1, tile_h=None,
                    matmul_dtype=jnp.bfloat16):
    """SimConv forward: relu(BN-folded conv). x_nchw: (N, Cin, H, W) float32."""
    N, Cin, H, W = x_nchw.shape
    k = int(w_hwio.shape[0])
    assert w_hwio.shape[1] == k and int(w_hwio.shape[2]) == Cin
    Cout = int(w_hwio.shape[3])
    pad = k // 2
    H_out = (H + 2 * pad - k) // stride + 1
    W_out = (W + 2 * pad - k) // stride + 1
    KC = k * k * Cin

    # ---- wrapper-side prep ---------------------------------------------------
    # NCHW -> NHWC, zero halo pad, then im2col over (kh, kw): all k*k taps are
    # packed into the matmul contraction dimension.  Stride is folded into the
    # strided slices here, so the kernel never does strided loads.
    x = jnp.transpose(x_nchw, (0, 2, 3, 1))
    xpad = jnp.pad(x, ((0, 0), (pad, pad), (pad, pad), (0, 0)))
    taps = []
    for kh in range(k):
        for kw in range(k):
            taps.append(xpad[:, kh:kh + (H_out - 1) * stride + 1:stride,
                             kw:kw + (W_out - 1) * stride + 1:stride, :])
    xk = jnp.concatenate(taps, axis=-1).reshape(N, H_out * W_out, KC)
    xk = xk.astype(matmul_dtype)
    # TODO(synk): for Cin >= 128 skip the k*k packing (direct per-tap dots) to
    # avoid the k^2 input-read inflation, and fold the im2col into an in-kernel
    # DMA gather for very large activations instead of materializing xk in HBM.

    # Lane-dense output: Cout padded up to a multiple of 128 (sliced off below).
    Cout_p = _round_up(Cout, _LANE)
    # TODO(synk): for tiny Cout an unpadded / channels-second output layout
    # would avoid the 128/Cout inflation of output HBM writes.
    w_p = jnp.pad(w_hwio.reshape(KC, Cout), ((0, 0), (0, Cout_p - Cout)))
    w_p = w_p.astype(matmul_dtype)                 # (kh, kw, ci) packing order
    b_p = jnp.pad(bias.reshape(-1).astype(jnp.float32),
                  (0, Cout_p - Cout)).reshape(1, Cout_p)

    vmem_limit, budget = _vmem_budget()
    itemsize = np.dtype(matmul_dtype).itemsize
    if tile_h is None:
        tile_h = _choose_tile_h(H_out, W_out, KC, Cout_p, itemsize, budget)
    assert H_out % tile_h == 0, (H_out, tile_h)
    num_strips = H_out // tile_h
    rows = tile_h * W_out
    if num_strips > 1:
        assert rows % 16 == 0, (tile_h, W_out)
    sub_rows = _choose_sub_rows(rows, Cout_p)

    kernel = functools.partial(_simconv_kernel, sub_rows=sub_rows)

    out = pl.pallas_call(
        kernel,
        out_shape=jax.ShapeDtypeStruct((N, H_out * W_out, Cout_p), jnp.float32),
        grid=(N, num_strips),
        in_specs=[
            pl.BlockSpec((1, rows, KC), lambda n, h: (n, h, 0)),
            pl.BlockSpec((KC, Cout_p), lambda n, h: (0, 0)),
            pl.BlockSpec((1, Cout_p), lambda n, h: (0, 0)),
        ],
        out_specs=pl.BlockSpec((1, rows, Cout_p), lambda n, h: (n, h, 0)),
        compiler_params=pltpu.CompilerParams(
            # No cross-step state -> both axes are safely 'parallel' (v7x can
            # core-split the strip axis even when N == 1); BlockSpec pipelining
            # prefetches across image boundaries, so no per-image DMA bubble.
            dimension_semantics=("parallel", "parallel"),
            vmem_limit_bytes=vmem_limit,
        ),
    )(xk, w_p, b_p)

    # (N, H_out*W_out, Cout_p) -> NCHW, dropping the Cout padding.
    out = out.reshape(N, H_out, W_out, Cout_p)[..., :Cout]
    return jnp.transpose(out, (0, 3, 1, 2)).astype(x_nchw.dtype)


def _fold_bn(w_hwio, gamma, beta, mean, var, eps=1e-5):
    """Fold eval-mode BatchNorm into conv weight (HWIO) + bias."""
    std = jnp.sqrt(var + eps)
    scale = gamma / std
    return w_hwio * scale[None, None, None, :], beta - mean * scale


def init_simconv_params(key, in_channels, out_channels, kernel_size):
    """Synthetic SimConv params: Conv2d(k, bias=False) + BatchNorm2d, folded."""
    ks = jax.random.split(key, 5)
    fan_in = in_channels * kernel_size * kernel_size
    bound = 1.0 / (fan_in ** 0.5)
    w = jax.random.uniform(ks[0],
                           (kernel_size, kernel_size, in_channels, out_channels),
                           jnp.float32, -bound, bound)
    gamma = 1.0 + 0.1 * jax.random.normal(ks[1], (out_channels,), jnp.float32)
    beta = 0.1 * jax.random.normal(ks[2], (out_channels,), jnp.float32)
    mean = 0.1 * jax.random.normal(ks[3], (out_channels,), jnp.float32)
    var = jax.random.uniform(ks[4], (out_channels,), jnp.float32, 0.5, 1.5)
    return _fold_bn(w, gamma, beta, mean, var)


def simconv_reference(x_nchw, w_hwio, bias, *, stride=1,
                      matmul_dtype=jnp.bfloat16):
    """Pure-JAX reference (lax conv) with the same bf16 operand rounding."""
    k = w_hwio.shape[0]
    pad = k // 2
    x = x_nchw.astype(matmul_dtype).astype(jnp.float32)
    w = jnp.transpose(w_hwio, (3, 2, 0, 1)).astype(matmul_dtype).astype(jnp.float32)
    y = lax.conv_general_dilated(
        x, w, (stride, stride), ((pad, pad), (pad, pad)),
        dimension_numbers=("NCHW", "OIHW", "NCHW"))
    y = y + bias.reshape(1, -1, 1, 1)
    return jnp.maximum(y, 0.0)


if __name__ == "__main__":
    key = jax.random.PRNGKey(0)
    k_x, k_p = jax.random.split(key)

    N, Cin, Cout, H, W, ksize, stride = 2, 4, 8, 16, 16, 3, 1
    x = jax.random.normal(k_x, (N, Cin, H, W), jnp.float32)
    w_folded, b_folded = init_simconv_params(k_p, Cin, Cout, ksize)

    out = simconv_forward(x, w_folded, b_folded, stride=stride)
    out = jax.block_until_ready(out)

    ref = simconv_reference(x, w_folded, b_folded, stride=stride)
    assert out.shape == (N, Cout, H, W), out.shape
    assert jnp.allclose(out, ref, atol=2e-2, rtol=2e-2), float(
        jnp.max(jnp.abs(out - ref)))

    print("KERNEL_OK")
</pallas_src>

<mosaic_0001>
module attributes {stable_mosaic.version = 11 : i64} {
  func.func @_simconv_kernel(%arg0: i32, %arg1: i32, %arg2: memref<1x256x36xbf16, #tpu.memory_space<vmem>>, %arg3: memref<36x128xbf16, #tpu.memory_space<vmem>>, %arg4: memref<1x128xf32, #tpu.memory_space<vmem>>, %arg5: memref<1x256x128xf32, #tpu.memory_space<vmem>>) attributes {dimension_semantics = [#tpu.dimension_semantics<parallel>, #tpu.dimension_semantics<parallel>], iteration_bounds = array<i64: 2, 1>, scalar_prefetch = 0 : i64, scratch_operands = 0 : i64, tpu.core_type = #tpu.core_type<tc>, window_params = [{transform_indices = @transform_0, window_bounds = array<i64: 1, 256, 36>}, {pipeline_mode = #tpu.pipeline_mode<synchronous>, transform_indices = @transform_1, window_bounds = array<i64: 36, 128>}, {pipeline_mode = #tpu.pipeline_mode<synchronous>, transform_indices = @transform_2, window_bounds = array<i64: 1, 128>}, {transform_indices = @transform_3, window_bounds = array<i64: 1, 256, 128>}]} {
    %c0 = arith.constant 0 : index
    %c0_0 = arith.constant 0 : index
    %0 = vector.load %arg3[%c0, %c0_0] : memref<36x128xbf16, #tpu.memory_space<vmem>>, vector<36x128xbf16>
    %c0_1 = arith.constant 0 : index
    %c0_2 = arith.constant 0 : index
    %1 = vector.load %arg4[%c0_1, %c0_2] : memref<1x128xf32, #tpu.memory_space<vmem>>, vector<1x128xf32>
    %2 = vector.shape_cast %1 : vector<1x128xf32> to vector<1x128xf32>
    %3 = vector.broadcast %2 : vector<1x128xf32> to vector<128x128xf32>
    %c0_3 = arith.constant 0 : index
    %c0_4 = arith.constant 0 : index
    %c0_5 = arith.constant 0 : index
    %4 = vector.load %arg2[%c0_3, %c0_4, %c0_5] : memref<1x256x36xbf16, #tpu.memory_space<vmem>>, vector<1x128x36xbf16>
    %5 = vector.shape_cast %4 : vector<1x128x36xbf16> to vector<128x36xbf16>
    %cst = arith.constant dense<0.000000e+00> : vector<128x128xf32>
    %6 = tpu.matmul %5, %0, %cst {dimension_numbers = #tpu.dot_dimension_numbers<[1], [0], [0], [1], [0, 0, 1, 1], [], []>} : vector<128x36xbf16>, vector<36x128xbf16>, vector<128x128xf32> -> vector<128x128xf32>
    %7 = arith.addf %6, %3 : vector<128x128xf32>
    %cst_6 = arith.constant 0.000000e+00 : f32
    %8 = vector.broadcast %cst_6 : f32 to vector<128x128xf32>
    %9 = arith.maximumf %7, %8 : vector<128x128xf32>
    %c0_7 = arith.constant 0 : index
    %c0_8 = arith.constant 0 : index
    %c0_9 = arith.constant 0 : index
    %10 = vector.load %arg5[%c0_7, %c0_8, %c0_9] : memref<1x256x128xf32, #tpu.memory_space<vmem>>, vector<1x128x128xf32>
    %11 = vector.shape_cast %10 : vector<1x128x128xf32> to vector<128x128xf32>
    %12 = vector.shape_cast %9 : vector<128x128xf32> to vector<1x128x128xf32>
    tpu.vector_store %arg5[%c0_7, %c0_8, %c0_9], %12 {strides = array<i32>} : memref<1x256x128xf32, #tpu.memory_space<vmem>>, vector<1x128x128xf32>,
    %c0_10 = arith.constant 0 : index
    %c128 = arith.constant 128 : index
    %c0_11 = arith.constant 0 : index
    %13 = vector.load %arg2[%c0_10, %c128, %c0_11] : memref<1x256x36xbf16, #tpu.memory_space<vmem>>, vector<1x128x36xbf16>
    %14 = vector.shape_cast %13 : vector<1x128x36xbf16> to vector<128x36xbf16>
    %cst_12 = arith.constant dense<0.000000e+00> : vector<128x128xf32>
    %15 = tpu.matmul %14, %0, %cst_12 {dimension_numbers = #tpu.dot_dimension_numbers<[1], [0], [0], [1], [0, 0, 1, 1], [], []>} : vector<128x36xbf16>, vector<36x128xbf16>, vector<128x128xf32> -> vector<128x128xf32>
    %16 = arith.addf %15, %3 : vector<128x128xf32>
    %cst_13 = arith.constant 0.000000e+00 : f32
    %17 = vector.broadcast %cst_13 : f32 to vector<128x128xf32>
    %18 = arith.maximumf %16, %17 : vector<128x128xf32>
    %c0_14 = arith.constant 0 : index
    %c128_15 = arith.constant 128 : index
    %c0_16 = arith.constant 0 : index
    %19 = vector.load %arg5[%c0_14, %c128_15, %c0_16] : memref<1x256x128xf32, #tpu.memory_space<vmem>>, vector<1x128x128xf32>
    %20 = vector.shape_cast %19 : vector<1x128x128xf32> to vector<128x128xf32>
    %21 = vector.shape_cast %18 : vector<128x128xf32> to vector<1x128x128xf32>
    tpu.vector_store %arg5[%c0_14, %c128_15, %c0_16], %21 {strides = array<i32>} : memref<1x256x128xf32, #tpu.memory_space<vmem>>, vector<1x128x128xf32>,
    return
  }
  func.func @transform_0(%arg0: i32, %arg1: i32) -> (i32, i32, i32) {
    %c0_i32 = arith.constant 0 : i32
    %c0_i32_0 = arith.constant 0 : i32
    return %arg0, %arg1, %c0_i32 : i32, i32, i32
  }
  func.func @transform_1(%arg0: i32, %arg1: i32) -> (i32, i32) {
    %c0_i32 = arith.constant 0 : i32
    %c0_i32_0 = arith.constant 0 : i32
    %c0_i32_1 = arith.constant 0 : i32
    return %c0_i32, %c0_i32_0 : i32, i32
  }
  func.func @transform_2(%arg0: i32, %arg1: i32) -> (i32, i32) {
    %c0_i32 = arith.constant 0 : i32
    %c0_i32_0 = arith.constant 0 : i32
    %c0_i32_1 = arith.constant 0 : i32
    return %c0_i32, %c0_i32_0 : i32, i32
  }
  func.func @transform_3(%arg0: i32, %arg1: i32) -> (i32, i32, i32) {
    %c0_i32 = arith.constant 0 : i32
    %c0_i32_0 = arith.constant 0 : i32
    return %arg0, %arg1, %c0_i32 : i32, i32, i32
  }
}

</mosaic_0001>

<llo_original>
// kernel: tpu_custom_call.1
$region0: #{tpu_custom_call.1}
  #allocation0 [shape = 'u32[]', space=smem, size = 0x4, offset = 0x4, fixed_abs, tag = 'smem constant byte address 0x4 - core index']
  #allocation1 [shape = 'u32[72,128]{1,0:T(1,128)}', space=vmem, size = 0x9000, scoped, tag = 'internal scratch']
  %s0 = inlined_call_operand.vmem [shape: bf16[2,256,36], index: 0, kind: input, shape index: {}]
  %s1 = inlined_call_operand.vmem [shape: bf16[36,128], index: 1, kind: input, shape index: {}]
  %s2 = inlined_call_operand.vmem [shape: f32[1,128], index: 2, kind: input, shape index: {}]
  %s3 = inlined_call_operand.hbm [shape: f32[2,256,128], index: 3, kind: output, shape index: {}]
  %s4 = sld [smem:[#allocation0]]
  $region45: #{tpu_custom_call.1} parent=0
    _
  %s6 = ssub.s32 1, %s4
  %s7 = scalar_select 0, %s6, %s4
  $region1: #{tpu_custom_call.1} parent=0
    #allocation2 [shape = 'u8[262144]{0}', space=vmem, size = 0x40000, scoped, tag = 'output window, operand 0']
    #allocation3 [shape = 's32[2]{0}', space=sflag, size = 0x8, scoped, tag = 'scoped memory for tpu_custom_call.1']
    %8 = vsyncpa [#allocation3], 0
    %s9 = scalar_lea.sflag [#allocation3], 1
    %10 = vsyncpa %s9, 0
    loop: start=0, step=1, limit=4
    $region2: #{tpu_custom_call.1} parent=1 // loop_pre_header
      _
    $region3: #{tpu_custom_call.1} parent=1 // loop_header
      %s12 = sphi 0, %s16
      %p13 = scmp.ge.s32.totalorder %s12, 4
      %s19 = sphi 0, %s31
      %s20 = sphi 0, %s27
      %s21 = sphi 0, %s19
      %s22 = sphi 0, %s20
      %s23 = sphi 0, %s21
      %s24 = sphi 0, %s22
      %s36 = sphi 0, %s38
      %s39 = sphi 0, %s36
      %s40 = sphi 0, %s39
      %s56 = sphi 0, %s40
      %s60 = sphi 0, %s60
      %s62 = sphi 0, %s60
      %s63 = sphi 0, %s62
      %s77 = sphi 0, %s63
      %s81 = sphi 0, %s81
      %s83 = sphi 0, %s81
      %s84 = sphi 0, %s83
      %s98 = sphi 0, %s84
      %s106 = sphi 0, %s108
      %s109 = sphi 0, %s106
      %s110 = sphi 0, %s109
      %s126 = sphi 0, %s110
    $region4: #{tpu_custom_call.1} parent=1 // loop_header_branch
      %15 = sbr.rel (%p13) target = $region8
    $region5: #{tpu_custom_call.1} parent=1 // loop_body
      %s17 = ssub.s32 %s12, 1
      %s18 = ssub.s32 %s12, 2
      %s25 = sadd.s32 1, %s20
      %p26 = scmp.ge.s32.totalorder %s25, 1
      %s27 = scalar_select %p26, 0, %s25
      %s28 = sadd.s32 1, %s19
      %s29 = scalar_select %p26, %s28, %s19
      %p30 = scmp.ge.s32.totalorder %s29, 2
      %s31 = scalar_select %p30, 0, %s29
      %s32 = ssub.s32 %s19, %s31
      %s33 = ssub.s32 %s20, %s27
      %s34 = sor.u32 %s32, %s33
      %p35 = scmp.eq.s32.totalorder %s34, 0
      %s37 = sadd.s32 %s36, 1
      %s38 = scalar_select %p35, %s36, %s37
      %p41 = pneg %p35
      %p42 = scmp.eq.s32.totalorder %s12, 1
      %p43 = por %p41, %p42
      %p44 = scmp.ne.s32.totalorder %s36, %s39
      %p45 = scmp.eq.s32.totalorder %s12, 0
      %p46 = por %p44, %p45
      %p47 = scmp.ne.s32.totalorder %s36, %s39
      %p48 = scmp.eq.s32.totalorder %s17, 1
      %p49 = por %p47, %p48
      %p50 = scmp.ne.s32.totalorder %s39, %s40
      %p51 = scmp.eq.s32.totalorder %s17, 0
      %p52 = por %p50, %p51
      %p53 = scmp.ne.s32.totalorder %s39, %s40
      %p54 = scmp.eq.s32.totalorder %s18, 1
      %p55 = por %p53, %p54
      %p57 = scmp.ne.s32.totalorder %s40, %s56
      %p58 = scmp.eq.s32.totalorder %s18, 0
      %p59 = por %p57, %p58
      %s61 = sadd.s32 %s60, 1
      %p64 = scmp.eq.s32.totalorder %s12, 1
      %p65 = scmp.ne.s32.totalorder %s60, %s62
      %p66 = scmp.eq.s32.totalorder %s12, 0
      %p67 = por %p65, %p66
      %p68 = scmp.ne.s32.totalorder %s60, %s62
      %p69 = scmp.eq.s32.totalorder %s17, 1
      %p70 = por %p68, %p69
      %p71 = scmp.ne.s32.totalorder %s62, %s63
      %p72 = scmp.eq.s32.totalorder %s17, 0
      %p73 = por %p71, %p72
      %p74 = scmp.ne.s32.totalorder %s62, %s63
      %p75 = scmp.eq.s32.totalorder %s18, 1
      %p76 = por %p74, %p75
      %p78 = scmp.ne.s32.totalorder %s63, %s77
      %p79 = scmp.eq.s32.totalorder %s18, 0
      %p80 = por %p78, %p79
      %s82 = sadd.s32 %s81, 1
      %p85 = scmp.eq.s32.totalorder %s12, 1
      %p86 = scmp.ne.s32.totalorder %s81, %s83
      %p87 = scmp.eq.s32.totalorder %s12, 0
      %p88 = por %p86, %p87
      %p89 = scmp.ne.s32.totalorder %s81, %s83
      %p90 = scmp.eq.s32.totalorder %s17, 1
      %p91 = por %p89, %p90
      %p92 = scmp.ne.s32.totalorder %s83, %s84
      %p93 = scmp.eq.s32.totalorder %s17, 0
      %p94 = por %p92, %p93
      %p95 = scmp.ne.s32.totalorder %s83, %s84
      %p96 = scmp.eq.s32.totalorder %s18, 1
      %p97 = por %p95, %p96
      %p99 = scmp.ne.s32.totalorder %s84, %s98
      %p100 = scmp.eq.s32.totalorder %s18, 0
      %p101 = por %p99, %p100
      %s102 = ssub.s32 %s19, %s31
      %s103 = ssub.s32 %s20, %s27
      %s104 = sor.u32 %s102, %s103
      %p105 = scmp.eq.s32.totalorder %s104, 0
      %s107 = sadd.s32 %s106, 1
      %s108 = scalar_select %p105, %s106, %s107
      %p111 = pneg %p105
      %p112 = scmp.eq.s32.totalorder %s12, 1
      %p113 = por %p111, %p112
      %p114 = scmp.ne.s32.totalorder %s106, %s109
      %p115 = scmp.eq.s32.totalorder %s12, 0
      %p116 = por %p114, %p115
      %p117 = scmp.ne.s32.totalorder %s106, %s109
      %p118 = scmp.eq.s32.totalorder %s17, 1
      %p119 = por %p117, %p118
      %p120 = scmp.ne.s32.totalorder %s109, %s110
      %p121 = scmp.eq.s32.totalorder %s17, 0
      %p122 = por %p120, %p121
      %p123 = scmp.ne.s32.totalorder %s109, %s110
      %p124 = scmp.eq.s32.totalorder %s18, 1
      %p125 = por %p123, %p124
      %p127 = scmp.ne.s32.totalorder %s110, %s126
      %p128 = scmp.eq.s32.totalorder %s18, 0
      %p129 = por %p127, %p128
      %p130 = scmp.le.s32.totalorder 1, %s12
      %p131 = scmp.lt.s32.totalorder %s12, 3
      %p132 = pnand %p130, %p131
      %p133 = pneg %p132
      // Predicated region
      $region9: #{tpu_custom_call.1} parent=5 // pred_check
        _
      $region10: #{tpu_custom_call.1} parent=5 // pred_check_branch
        %135 = sbr.rel (%p132) target = $region12
      $region11: #{tpu_custom_call.1} parent=5 // pred_region
        %s136 = ssub.s32 %s12, 1
        // Predicated region
        $region13: #{tpu_custom_call.1} parent=11 // pred_check
          %p137 = pneg %p73
        $region14: #{tpu_custom_call.1} parent=11 // pred_check_branch
          %139 = sbr.rel (%p137) target = $region16
        $region15: #{tpu_custom_call.1} parent=11 // pred_region
          _
        $region16: #{tpu_custom_call.1} parent=11 // pred_fallthru
          _
        // Predicated region
        $region17: #{tpu_custom_call.1} parent=11 // pred_check
          %p140 = pneg %p94
        $region18: #{tpu_custom_call.1} parent=11 // pred_check_branch
          %142 = sbr.rel (%p140) target = $region20
        $region19: #{tpu_custom_call.1} parent=11 // pred_region
          _
        $region20: #{tpu_custom_call.1} parent=11 // pred_fallthru
          _
      $region12: #{tpu_custom_call.1} parent=5 // pred_fallthru
        _
      %p143 = scmp.lt.s32.totalorder %s12, 2
      // Predicated region
      $region21: #{tpu_custom_call.1} parent=5 // pred_check
        %p144 = pneg %p143
      $region22: #{tpu_custom_call.1} parent=5 // pred_check_branch
        %146 = sbr.rel (%p144) target = $region24
      $region23: #{tpu_custom_call.1} parent=5 // pred_region
        // Predicated region
        $region25: #{tpu_custom_call.1} parent=23 // pred_check
          %p147 = pneg %p46
        $region26: #{tpu_custom_call.1} parent=23 // pred_check_branch
          %149 = sbr.rel (%p147) target = $region28
        $region27: #{tpu_custom_call.1} parent=23 // pred_region
          %s150 = smul.u32 32, %s20
          %p151 = scmp.lt.s32.totalorder %s19, 1
          %s152 = scalar_select %p151, %s19, 1
          %p153 = scmp.lt.s32.totalorder %s150, 31
          %s154 = scalar_select %p153, %s150, 31
          %s155 = smul.addr %s152, 32
          %s156 = sadd.s32 %s154, %s155
          %s157 = smul.addr %s156, 4
          %s158 = scalar_lea.vmem %s0, %s157
          %s159 = smul.u32 32, %s20
        $region28: #{tpu_custom_call.1} parent=23 // pred_fallthru
          _
      $region24: #{tpu_custom_call.1} parent=5 // pred_fallthru
        _
      %p160 = scmp.le.s32.totalorder 1, %s12
      %p161 = scmp.lt.s32.totalorder %s12, 3
      %p162 = pnand %p160, %p161
      %p163 = pneg %p162
      // Predicated region
      $region29: #{tpu_custom_call.1} parent=5 // pred_check
        _
      $region30: #{tpu_custom_call.1} parent=5 // pred_check_branch
        %165 = sbr.rel (%p162) target = $region32
      $region31: #{tpu_custom_call.1} parent=5 // pred_region
        %s166 = ssub.s32 %s12, 1
        %s167 = smul.u32 32, %s22
        %p168 = scmp.lt.s32.totalorder %s21, 1
        %s169 = scalar_select %p168, %s21, 1
        %p170 = scmp.lt.s32.totalorder %s167, 31
        %s171 = scalar_select %p170, %s167, 31
        %s172 = smul.addr %s169, 32
        %s173 = sadd.s32 %s171, %s172
        %s174 = smul.addr %s173, 4
        %s175 = scalar_lea.vmem %s0, %s174
        %p176 = pneg %p52
        %p177 = pneg %p49
        %p178 = pneg %p73
        %p179 = pneg %p70
        %p180 = pneg %p94
        %p181 = pneg %p91
        %p182 = pneg %p122
        %p183 = pneg %p119
        %s184 = sand.u32 %s109, 1
        %s185 = scalar_lea.sflag [#allocation3], %s184
        %s186 = sand.u32 %s109, 1
        %s187 = smul.addr %s186, 256
        %s188 = scalar_lea.vmem [#allocation2], %s187
        %s189 = smul.u32 32, %s22
        %p190 = scmp.lt.s32.totalorder %s21, 1
        %s191 = scalar_select %p190, %s21, 1
        %p192 = scmp.lt.s32.totalorder %s189, 31
        %s193 = scalar_select %p192, %s189, 31
        %s194 = smul.addr %s191, 32
        %s195 = sadd.s32 %s193, %s194
        %s196 = smul.addr %s195, 4
        %s197 = scalar_lea.vmem %s0, %s196
        %s198 = smul.u32 32, %s22
        %s199 = smul.u32 32, %s22
        %v201 = vld [vmem:[%s1] sm:$0xf]
        %v202 = vld [vmem:[%s1 + $0x4] sm:$0xf]
        %v203 = vld [vmem:[%s1 + $0x8] sm:$0xf]
        %v204 = vld [vmem:[%s1 + $0xc] sm:$0xf]
        %v205 = vld [vmem:[%s1 + $0x10] sm:$0x3]
        %v206 = vld [vmem:[%s2] sm:$0x1]
        %v208 = vperm.slane %v206, 0
        %v210 = vld [vmem:[%s197] sm:$0xf]
        %v211 = vld [vmem:[%s197 + $0x4] sm:$0xf]
        %v212 = vld [vmem:[%s197 + $0x8] sm:$0xf]
        %v213 = vld [vmem:[%s197 + $0xc] sm:$0xf]
        %v214 = vld [vmem:[%s197 + $0x10] sm:$0xf]
        %v215 = vld [vmem:[%s197 + $0x14] sm:$0xf]
        %v216 = vld [vmem:[%s197 + $0x18] sm:$0xf]
        %v217 = vld [vmem:[%s197 + $0x1c] sm:$0xf]
        %v218 = vld [vmem:[%s197 + $0x20] sm:$0xf]
        %v219 = vld [vmem:[%s197 + $0x24] sm:$0xf]
        %v220 = vld [vmem:[%s197 + $0x28] sm:$0xf]
        %v221 = vld [vmem:[%s197 + $0x2c] sm:$0xf]
        %v222 = vld [vmem:[%s197 + $0x30] sm:$0xf]
        %v223 = vld [vmem:[%s197 + $0x34] sm:$0xf]
        %v224 = vld [vmem:[%s197 + $0x38] sm:$0xf]
        %v225 = vld [vmem:[%s197 + $0x3c] sm:$0xf]
        %v242 = vunpack.c.l.b16 %v210
        %v243 = vunpack.c.l.b16 %v211
        %v244 = vunpack.c.l.b16 %v212
        %v245 = vunpack.c.l.b16 %v213
        %v246 = vunpack.c.l.b16 %v214
        %v247 = vunpack.c.l.b16 %v215
        %v248 = vunpack.c.l.b16 %v216
        %v249 = vunpack.c.l.b16 %v217
        %v250 = vunpack.c.l.b16 %v218
        %v251 = vunpack.c.l.b16 %v219
        %v252 = vunpack.c.l.b16 %v220
        %v253 = vunpack.c.l.b16 %v221
        %v254 = vunpack.c.l.b16 %v222
        %v255 = vunpack.c.l.b16 %v223
        %v256 = vunpack.c.l.b16 %v224
        %v257 = vunpack.c.l.b16 %v225
        %v258 = vpack.c.b16 %v243, %v242
        %v259 = vpack.c.b16 %v245, %v244
        %v260 = vpack.c.b16 %v247, %v246
        %v261 = vpack.c.b16 %v249, %v248
        %v262 = vpack.c.b16 %v251, %v250
        %v263 = vpack.c.b16 %v253, %v252
        %v264 = vpack.c.b16 %v255, %v254
        %v265 = vpack.c.b16 %v257, %v256
        %v271 = vunpack.c.l.b16 %v201
        %v272 = vunpack.c.l.b16 %v202
        %v273 = vunpack.c.l.b16 %v203
        %v274 = vunpack.c.l.b16 %v204
        %v275 = vunpack.c.l.b16 %v205
        %v276 = vpack.c.b16 %v272, %v271
        %v277 = vpack.c.b16 %v274, %v273
        %v278 = vpack.c.b16 %v275, %v275
        %vm281 = vcmask 293888
        %v283 = vsel %vm281, %v258, 0
        %v286 = vsel %vm281, %v259, 0
        %v289 = vsel %vm281, %v260, 0
        %v292 = vsel %vm281, %v261, 0
        %v295 = vsel %vm281, %v262, 0
        %v298 = vsel %vm281, %v263, 0
        %v301 = vsel %vm281, %v264, 0
        %v304 = vsel %vm281, %v265, 0
        %vm306 = vcmask 1041408
        %v308 = vsel %vm306, %v278, 0
        %310 = vmatpush.bf16.msra.mxu0 0
        %311 = vmatpush.bf16.msra.mxu0 0
        %312 = vmatpush.bf16.msra.mxu0 0
        %313 = vmatpush.bf16.msra.mxu0 0
        %314 = vmatpush.bf16.msra.mxu0 0
        %315 = vmatpush.bf16.msra.mxu0 %v308
        %316 = vmatpush.bf16.msra.mxu0 %v277
        %317 = vmatpush.bf16.msra.mxu0 %v276
        %318 = vmatmul.bf16.gmra.mxu0 %v283
        %v319 = vpop.f32.mrf.mxu0
        %v320 = vadd.f32 %v208, %v319
        %v321 = vpop.f32.mrf.mxu0
        %v322 = vadd.f32 %v208, %v321
        %323 = vmatmul.bf16.gmra.mxu0 %v286
        %v324 = vpop.f32.mrf.mxu0
        %v325 = vadd.f32 %v208, %v324
        %v326 = vpop.f32.mrf.mxu0
        %v327 = vadd.f32 %v208, %v326
        %328 = vmatmul.bf16.gmra.mxu0 %v289
        %v329 = vpop.f32.mrf.mxu0
        %v330 = vadd.f32 %v208, %v329
        %v331 = vpop.f32.mrf.mxu0
        %v332 = vadd.f32 %v208, %v331
        %333 = vmatmul.bf16.gmra.mxu0 %v292
        %v334 = vpop.f32.mrf.mxu0
        %v335 = vadd.f32 %v208, %v334
        %v336 = vpop.f32.mrf.mxu0
        %v337 = vadd.f32 %v208, %v336
        %338 = vmatmul.bf16.gmra.mxu0 %v295
        %v339 = vpop.f32.mrf.mxu0
        %v340 = vadd.f32 %v208, %v339
        %v341 = vpop.f32.mrf.mxu0
        %v342 = vadd.f32 %v208, %v341
        %343 = vmatmul.bf16.gmra.mxu0 %v298
        %v344 = vpop.f32.mrf.mxu0
        %v345 = vadd.f32 %v208, %v344
        %v346 = vpop.f32.mrf.mxu0
        %v347 = vadd.f32 %v208, %v346
        %348 = vmatmul.bf16.gmra.mxu0 %v301
        %v349 = vpop.f32.mrf.mxu0
        %v350 = vadd.f32 %v208, %v349
        %v351 = vpop.f32.mrf.mxu0
        %v352 = vadd.f32 %v208, %v351
        %353 = vmatmul.bf16.gmra.mxu0 %v304
        %v354 = vpop.f32.mrf.mxu0
        %v355 = vadd.f32 %v208, %v354
        %v356 = vpop.f32.mrf.mxu0
        %v357 = vadd.f32 %v208, %v356
        %358 = vdwg.mxu0
        %v359 = vmax.f32 %v320, 0.0
        %v360 = vmax.f32 %v322, 0.0
        %v361 = vmax.f32 %v325, 0.0
        %v362 = vmax.f32 %v327, 0.0
        %v363 = vmax.f32 %v330, 0.0
        %v364 = vmax.f32 %v332, 0.0
        %v365 = vmax.f32 %v335, 0.0
        %v366 = vmax.f32 %v337, 0.0
        %v367 = vmax.f32 %v340, 0.0
        %v368 = vmax.f32 %v342, 0.0
        %v369 = vmax.f32 %v345, 0.0
        %v370 = vmax.f32 %v347, 0.0
        %v371 = vmax.f32 %v350, 0.0
        %v372 = vmax.f32 %v352, 0.0
        %v373 = vmax.f32 %v355, 0.0
        %v374 = vmax.f32 %v357, 0.0
        %375 = vst [vmem:[%s188] sm:$0xff] %v359
        %376 = vst [vmem:[%s188 + $0x8] sm:$0xff] %v360
        %377 = vst [vmem:[%s188 + $0x10] sm:$0xff] %v361
        %378 = vst [vmem:[%s188 + $0x18] sm:$0xff] %v362
        %379 = vst [vmem:[%s188 + $0x20] sm:$0xff] %v363
        %380 = vst [vmem:[%s188 + $0x28] sm:$0xff] %v364
        %381 = vst [vmem:[%s188 + $0x30] sm:$0xff] %v365
        %382 = vst [vmem:[%s188 + $0x38] sm:$0xff] %v366
        %383 = vst [vmem:[%s188 + $0x40] sm:$0xff] %v367
        %384 = vst [vmem:[%s188 + $0x48] sm:$0xff] %v368
        %385 = vst [vmem:[%s188 + $0x50] sm:$0xff] %v369
        %386 = vst [vmem:[%s188 + $0x58] sm:$0xff] %v370
        %387 = vst [vmem:[%s188 + $0x60] sm:$0xff] %v371
        %388 = vst [vmem:[%s188 + $0x68] sm:$0xff] %v372
        %389 = vst [vmem:[%s188 + $0x70] sm:$0xff] %v373
        %390 = vst [vmem:[%s188 + $0x78] sm:$0xff] %v374
        %v391 = vld [vmem:[%s197 + $0x40] sm:$0xf]
        %v392 = vld [vmem:[%s197 + $0x44] sm:$0xf]
        %v393 = vld [vmem:[%s197 + $0x48] sm:$0xf]
        %v394 = vld [vmem:[%s197 + $0x4c] sm:$0xf]
        %v395 = vld [vmem:[%s197 + $0x50] sm:$0xf]
        %v396 = vld [vmem:[%s197 + $0x54] sm:$0xf]
        %v397 = vld [vmem:[%s197 + $0x58] sm:$0xf]
        %v398 = vld [vmem:[%s197 + $0x5c] sm:$0xf]
        %v399 = vld [vmem:[%s197 + $0x60] sm:$0xf]
        %v400 = vld [vmem:[%s197 + $0x64] sm:$0xf]
        %v401 = vld [vmem:[%s197 + $0x68] sm:$0xf]
        %v402 = vld [vmem:[%s197 + $0x6c] sm:$0xf]
        %v403 = vld [vmem:[%s197 + $0x70] sm:$0xf]
        %v404 = vld [vmem:[%s197 + $0x74] sm:$0xf]
        %v405 = vld [vmem:[%s197 + $0x78] sm:$0xf]
        %v406 = vld [vmem:[%s197 + $0x7c] sm:$0xf]
        %v423 = vunpack.c.l.b16 %v391
        %v424 = vunpack.c.l.b16 %v392
        %v425 = vunpack.c.l.b16 %v393
        %v426 = vunpack.c.l.b16 %v394
        %v427 = vunpack.c.l.b16 %v395
        %v428 = vunpack.c.l.b16 %v396
        %v429 = vunpack.c.l.b16 %v397
        %v430 = vunpack.c.l.b16 %v398
        %v431 = vunpack.c.l.b16 %v399
        %v432 = vunpack.c.l.b16 %v400
        %v433 = vunpack.c.l.b16 %v401
        %v434 = vunpack.c.l.b16 %v402
        %v435 = vunpack.c.l.b16 %v403
        %v436 = vunpack.c.l.b16 %v404
        %v437 = vunpack.c.l.b16 %v405
        %v438 = vunpack.c.l.b16 %v406
        %v439 = vpack.c.b16 %v424, %v423
        %v440 = vpack.c.b16 %v426, %v425
        %v441 = vpack.c.b16 %v428, %v427
        %v442 = vpack.c.b16 %v430, %v429
        %v443 = vpack.c.b16 %v432, %v431
        %v444 = vpack.c.b16 %v434, %v433
        %v445 = vpack.c.b16 %v436, %v435
        %v446 = vpack.c.b16 %v438, %v437
        %v448 = vsel %vm281, %v439, 0
        %v451 = vsel %vm281, %v440, 0
        %v454 = vsel %vm281, %v441, 0
        %v457 = vsel %vm281, %v442, 0
        %v460 = vsel %vm281, %v443, 0
        %v463 = vsel %vm281, %v444, 0
        %v466 = vsel %vm281, %v445, 0
        %v469 = vsel %vm281, %v446, 0
        %471 = vmatpush.bf16.msra.mxu0 0
        %472 = vmatpush.bf16.msra.mxu0 0
        %473 = vmatpush.bf16.msra.mxu0 0
        %474 = vmatpush.bf16.msra.mxu0 0
        %475 = vmatpush.bf16.msra.mxu0 0
        %476 = vmatpush.bf16.msra.mxu0 %v308
        %477 = vmatpush.bf16.msra.mxu0 %v277
        %478 = vmatpush.bf16.msra.mxu0 %v276
        %479 = vmatmul.bf16.gmra.mxu0 %v448
        %v480 = vpop.f32.mrf.mxu0
        %v481 = vadd.f32 %v208, %v480
        %v482 = vpop.f32.mrf.mxu0
        %v483 = vadd.f32 %v208, %v482
        %484 = vmatmul.bf16.gmra.mxu0 %v451
        %v485 = vpop.f32.mrf.mxu0
        %v486 = vadd.f32 %v208, %v485
        %v487 = vpop.f32.mrf.mxu0
        %v488 = vadd.f32 %v208, %v487
        %489 = vmatmul.bf16.gmra.mxu0 %v454
        %v490 = vpop.f32.mrf.mxu0
        %v491 = vadd.f32 %v208, %v490
        %v492 = vpop.f32.mrf.mxu0
        %v493 = vadd.f32 %v208, %v492
        %494 = vmatmul.bf16.gmra.mxu0 %v457
        %v495 = vpop.f32.mrf.mxu0
        %v496 = vadd.f32 %v208, %v495
        %v497 = vpop.f32.mrf.mxu0
        %v498 = vadd.f32 %v208, %v497
        %499 = vmatmul.bf16.gmra.mxu0 %v460
        %v500 = vpop.f32.mrf.mxu0
        %v501 = vadd.f32 %v208, %v500
        %v502 = vpop.f32.mrf.mxu0
        %v503 = vadd.f32 %v208, %v502
        %504 = vmatmul.bf16.gmra.mxu0 %v463
        %v505 = vpop.f32.mrf.mxu0
        %v506 = vadd.f32 %v208, %v505
        %v507 = vpop.f32.mrf.mxu0
        %v508 = vadd.f32 %v208, %v507
        %509 = vmatmul.bf16.gmra.mxu0 %v466
        %v510 = vpop.f32.mrf.mxu0
        %v511 = vadd.f32 %v208, %v510
        %v512 = vpop.f32.mrf.mxu0
        %v513 = vadd.f32 %v208, %v512
        %514 = vmatmul.bf16.gmra.mxu0 %v469
        %v515 = vpop.f32.mrf.mxu0
        %v516 = vadd.f32 %v208, %v515
        %v517 = vpop.f32.mrf.mxu0
        %v518 = vadd.f32 %v208, %v517
        %519 = vdwg.mxu0
        %v520 = vmax.f32 %v481, 0.0
        %v521 = vmax.f32 %v483, 0.0
        %v522 = vmax.f32 %v486, 0.0
        %v523 = vmax.f32 %v488, 0.0
        %v524 = vmax.f32 %v491, 0.0
        %v525 = vmax.f32 %v493, 0.0
        %v526 = vmax.f32 %v496, 0.0
        %v527 = vmax.f32 %v498, 0.0
        %v528 = vmax.f32 %v501, 0.0
        %v529 = vmax.f32 %v503, 0.0
        %v530 = vmax.f32 %v506, 0.0
        %v531 = vmax.f32 %v508, 0.0
        %v532 = vmax.f32 %v511, 0.0
        %v533 = vmax.f32 %v513, 0.0
        %v534 = vmax.f32 %v516, 0.0
        %v535 = vmax.f32 %v518, 0.0
        %536 = vst [vmem:[%s188 + $0x80] sm:$0xff] %v520
        %537 = vst [vmem:[%s188 + $0x88] sm:$0xff] %v521
        %538 = vst [vmem:[%s188 + $0x90] sm:$0xff] %v522
        %539 = vst [vmem:[%s188 + $0x98] sm:$0xff] %v523
        %540 = vst [vmem:[%s188 + $0xa0] sm:$0xff] %v524
        %541 = vst [vmem:[%s188 + $0xa8] sm:$0xff] %v525
        %542 = vst [vmem:[%s188 + $0xb0] sm:$0xff] %v526
        %543 = vst [vmem:[%s188 + $0xb8] sm:$0xff] %v527
        %544 = vst [vmem:[%s188 + $0xc0] sm:$0xff] %v528
        %545 = vst [vmem:[%s188 + $0xc8] sm:$0xff] %v529
        %546 = vst [vmem:[%s188 + $0xd0] sm:$0xff] %v530
        %547 = vst [vmem:[%s188 + $0xd8] sm:$0xff] %v531
        %548 = vst [vmem:[%s188 + $0xe0] sm:$0xff] %v532
        %549 = vst [vmem:[%s188 + $0xe8] sm:$0xff] %v533
        %550 = vst [vmem:[%s188 + $0xf0] sm:$0xff] %v534
        %551 = vst [vmem:[%s188 + $0xf8] sm:$0xff] %v535
        %s552 = sand.u32 %s109, 1
        %s553 = scalar_lea.sflag [#allocation3], %s552
        %s554 = sand.u32 %s109, 1
        %s555 = smul.addr %s554, 256
        %s556 = scalar_lea.vmem [#allocation2], %s555
        // Predicated region
        $region33: #{tpu_custom_call.1} parent=31 // pred_check
          %p557 = pneg %p119
        $region34: #{tpu_custom_call.1} parent=31 // pred_check_branch
          %559 = sbr.rel (%p557) target = $region36
        $region35: #{tpu_custom_call.1} parent=31 // pred_region
          %s560 = smul.u32 32, %s22
          %562 = vsyncadd %s553, 0
          %s563 = smul.addr %s21, 32
          %s564 = sadd.s32 %s560, %s563
          %s565 = smul.addr %s564, 8
          %s566 = scalar_lea.hbm %s3, %s565
          %s567 = sshll.u32 %s556, 4
          %s568 = int_to_ptr.vmem [resolvable:$true] %s567
          %s569 = sshll.u32 %s566, 4
          %s570 = int_to_ptr.hbm [resolvable:$true] %s569
          %575 = dma.vmem_to_hbm [thread:$0]  %s568, 4096, %s570, %s553, 128, 128, 8
        $region36: #{tpu_custom_call.1} parent=31 // pred_fallthru
          _
      $region32: #{tpu_custom_call.1} parent=5 // pred_fallthru
        _
      %p576 = scmp.le.s32.totalorder 2, %s12
      // Predicated region
      $region37: #{tpu_custom_call.1} parent=5 // pred_check
        %p577 = pneg %p576
      $region38: #{tpu_custom_call.1} parent=5 // pred_check_branch
        %579 = sbr.rel (%p577) target = $region40
      $region39: #{tpu_custom_call.1} parent=5 // pred_region
        %s580 = ssub.s32 %s12, 2
        // Predicated region
        $region41: #{tpu_custom_call.1} parent=39 // pred_check
          %p581 = pneg %p125
        $region42: #{tpu_custom_call.1} parent=39 // pred_check_branch
          %583 = sbr.rel (%p581) target = $region44
        $region43: #{tpu_custom_call.1} parent=39 // pred_region
          %s584 = sand.u32 %s110, 1
          %s585 = scalar_lea.sflag [#allocation3], %s584
          %s586 = sand.u32 %s110, 1
          %s587 = smul.addr %s586, 256
          %s588 = scalar_lea.vmem [#allocation2], %s587
          %590 = dma.done %s585, 4096
        $region44: #{tpu_custom_call.1} parent=39 // pred_fallthru
          _
      $region40: #{tpu_custom_call.1} parent=5 // pred_fallthru
        _
    $region6: #{tpu_custom_call.1} parent=1 // loop_footer
      %s16 = sadd.s32 1, %s12
    $region7: #{tpu_custom_call.1} parent=1 // loop_footer_branch
      %11 = sbr.rel target = $region3
    $region8: #{tpu_custom_call.1} parent=1 // loop_exit
      _
    %591 = vsyncpa [#allocation3], 1
    %s592 = scalar_lea.sflag [#allocation3], 1
    %593 = vsyncpa %s592, 1

</llo_original>
